<compile_context>
chip_gen: v7x
topology: tpu7x:2x2x1
jax: 0.10.0
libtpu: 0.0.40
codegen_flags: <defaults>
</compile_context>

<pallas_src>
import jax
import jax.numpy as jnp
from jax import lax
from jax.experimental import pallas as pl
from jax.experimental.pallas import tpu as pltpu


def _round_up(x, m):
    return ((x + m - 1) // m) * m


def _sublane(dtype):
    # Second-to-last-dim packing requirement: 8 for 4-byte, 16 for 2-byte, 32 for 1-byte.
    return max(8, 32 // jnp.dtype(dtype).itemsize)


def _alignment_kernel(ctx_ref, asp_ref, w_ref, out_ref):
    # ctx_ref: (bb, lc, D), asp_ref: (bb, la, D), w_ref: (3, D), out_ref: (bb, lc, la)
    D = ctx_ref.shape[-1]
    ctx = ctx_ref[...].astype(jnp.float32)
    asp = asp_ref[...].astype(jnp.float32)
    w = w_ref[...].astype(jnp.float32)          # (3, D)
    w1 = w[0].reshape(1, 1, D)
    w2 = w[1].reshape(1, 1, D)
    w3 = w[2].reshape(1, 1, D)

    # term1/term2: VPU multiply + lane reduce (keeps the MXU free for term3).
    term1 = jnp.sum(ctx * w1, axis=-1, keepdims=True)            # (bb, lc, 1)
    term2 = jnp.sum(asp * w2, axis=-1)[:, None, :]               # (bb, 1, la)

    # term3: batched contraction over D on the MXU (no explicit transpose).
    cw3 = ctx * w3
    if jnp.dtype(ctx_ref.dtype) == jnp.dtype(jnp.bfloat16):
        # Feed bf16 operands to the MXU (full-rate) and accumulate in f32.
        lhs = cw3.astype(jnp.bfloat16)
        rhs = asp_ref[...]
    else:
        lhs = cw3
        rhs = asp
    term3 = lax.dot_general(
        lhs, rhs,
        dimension_numbers=(((2,), (2,)), ((0,), (0,))),
        preferred_element_type=jnp.float32)                      # (bb, lc, la)

    out_ref[...] = (term1 + term2 + term3).astype(out_ref.dtype)


def _step_vmem_bytes(bb, lc_blk, la_blk, D, in_dtype):
    """Per-grid-step VMEM estimate: lane/sublane-padded, double-buffered DMA
    buffers plus in-kernel f32 temporaries."""
    in_isz = jnp.dtype(in_dtype).itemsize
    sub_in = _sublane(in_dtype)
    Dl = _round_up(D, 128)
    ctx_b = bb * _round_up(lc_blk, sub_in) * Dl * in_isz
    asp_b = bb * _round_up(la_blk, sub_in) * Dl * in_isz
    out_b = bb * _round_up(lc_blk, 8) * _round_up(la_blk, 128) * 4
    pipelined = 2 * (ctx_b + asp_b + out_b)                      # double-buffered
    ctx_f32 = bb * _round_up(lc_blk, 8) * Dl * 4
    asp_f32 = bb * _round_up(la_blk, 8) * Dl * 4
    temps = 2 * ctx_f32 + asp_f32 + out_b                        # ctx, cw3, asp, sum tile
    return pipelined + temps


def alignment_matrix(ctx, asp, w_u):
    """ctx: (B, Lc, D), asp: (B, La, D), w_u: (3*D, 1) -> (B, Lc, La) float32."""
    B, Lc, D = ctx.shape
    Bb, La, Da = asp.shape
    assert Bb == B and Da == D and w_u.shape == (3 * D, 1)

    w = w_u.reshape(3, D)  # rows = [w1, w2, w3] (tiny; re-used every grid step)
    in_dtype = ctx.dtype
    itemsize = jnp.dtype(in_dtype).itemsize

    # --- generation-aware VMEM budget ------------------------------------------------
    try:
        vmem_cap = int(getattr(pltpu.get_tpu_info(), "vmem_capacity_bytes", 64 << 20))
    except Exception:
        vmem_cap = 64 << 20
    small_vmem = vmem_cap <= (80 << 20)          # v7x-class: 64 MiB VMEM, 2 TensorCores
    if small_vmem:
        vmem_limit = min(48 << 20, int(vmem_cap * 3 // 4))
        step_budget = 36 << 20
        min_parallel = 2                          # keep both v7x TCs busy
        lc_target, la_target = 512, 1024
    else:                                         # v5e / v6e: 128 MiB VMEM, 1 TC
        vmem_limit = min(96 << 20, int(vmem_cap * 3 // 4))
        step_budget = 72 << 20
        min_parallel = 1
        lc_target, la_target = 512, 2048

    # --- balanced blocks, no wrapper-side padding -------------------------------------
    sub = max(_sublane(in_dtype), 8)              # lc_blk is sublane dim for inputs & f32 out
    if Lc <= lc_target:
        lc_blk = Lc                               # equal-to-full-dim blocks are always legal
    else:
        lc_blk = _round_up(pl.cdiv(Lc, pl.cdiv(Lc, lc_target)), sub)
    if La <= la_target:
        la_blk = La
    else:
        la_blk = _round_up(pl.cdiv(La, pl.cdiv(La, la_target)), 128)

    # Shrink if a single-step working set would blow the budget (large D).
    while _step_vmem_bytes(1, lc_blk, la_blk, D, in_dtype) > step_budget:
        if la_blk > 128 and la_blk >= lc_blk:
            la_blk = max(128, _round_up(la_blk // 2, 128))
        elif lc_blk > sub:
            lc_blk = max(sub, _round_up(lc_blk // 2, sub))
        else:
            break

    n_lc = pl.cdiv(Lc, lc_blk)
    n_la = pl.cdiv(La, la_blk)

    # --- batch block: fatter steps amortize ~0.35us/step overhead; keep at least
    #     `min_parallel` independent grid points so both v7x cores have work -----------
    bb = 1
    while (B % (bb * 2) == 0
           and _step_vmem_bytes(bb * 2, lc_blk, la_blk, D, in_dtype) <= step_budget
           and (B // (bb * 2)) * n_lc * n_la >= min_parallel):
        bb *= 2
    n_b = B // bb

    # --- grid axis order: re-fetch the cheaper operand on the inner axis --------------
    asp_refetch = (n_lc - 1) * B * La * D * itemsize   # order (b,i,j): asp re-read per i
    ctx_refetch = (n_la - 1) * B * Lc * D * itemsize   # order (b,j,i): ctx re-read per j
    if asp_refetch <= ctx_refetch:
        grid = (n_b, n_lc, n_la)
        ctx_map = lambda b, i, j: (b, i, 0)
        asp_map = lambda b, i, j: (b, j, 0)
        w_map = lambda b, i, j: (0, 0)
        out_map = lambda b, i, j: (b, i, j)
    else:
        grid = (n_b, n_la, n_lc)
        ctx_map = lambda b, j, i: (b, i, 0)
        asp_map = lambda b, j, i: (b, j, 0)
        w_map = lambda b, j, i: (0, 0)
        out_map = lambda b, j, i: (b, i, j)

    return pl.pallas_call(
        _alignment_kernel,
        out_shape=jax.ShapeDtypeStruct((B, Lc, La), jnp.float32),
        grid_spec=pltpu.PrefetchScalarGridSpec(
            num_scalar_prefetch=0,
            grid=grid,
            in_specs=[
                pl.BlockSpec((bb, lc_blk, D), ctx_map),
                pl.BlockSpec((bb, la_blk, D), asp_map),
                pl.BlockSpec((3, D), w_map),
            ],
            out_specs=pl.BlockSpec((bb, lc_blk, la_blk), out_map),
        ),
        compiler_params=pltpu.CompilerParams(
            dimension_semantics=("parallel", "parallel", "parallel"),
            vmem_limit_bytes=int(vmem_limit)),
    )(ctx, asp, w)


def alignment_matrix_ref(ctx, asp, w_u):
    """Pure-JAX reference mirroring the PyTorch double loop."""
    B, Lc, D = ctx.shape
    w1 = w_u[:D, 0]
    w2 = w_u[D:2 * D, 0]
    w3 = w_u[2 * D:, 0]
    t1 = jnp.einsum("bid,d->bi", ctx, w1)[:, :, None]
    t2 = jnp.einsum("bjd,d->bj", asp, w2)[:, None, :]
    t3 = jnp.einsum("bid,bjd->bij", ctx * w3[None, None, :], asp)
    return (t1 + t2 + t3).astype(jnp.float32)


if __name__ == "__main__":
    key = jax.random.PRNGKey(0)
    k1, k2, k3 = jax.random.split(key, 3)

    # Small shapes consistent with the module: hidden_dim=16 -> D = 2*hidden_dim = 32.
    batch, hidden_dim, ctx_len, asp_len = 2, 16, 8, 8
    D = 2 * hidden_dim
    ctx = jax.random.normal(k1, (batch, ctx_len, D), dtype=jnp.float32)
    asp = jax.random.normal(k2, (batch, asp_len, D), dtype=jnp.float32)
    w_u = jax.random.normal(k3, (6 * hidden_dim, 1), dtype=jnp.float32) * 0.1

    out = alignment_matrix(ctx, asp, w_u)
    jax.block_until_ready(out)
    ref = alignment_matrix_ref(ctx, asp, w_u)
    assert out.shape == (batch, ctx_len, asp_len)
    assert jnp.allclose(out, ref, atol=1e-4, rtol=1e-4)

    # Second check: exercises ragged boundary blocks (Lc/La larger than the block
    # targets and not multiples of them) on the no-pad / no-slice path.
    k4, k5, k6 = jax.random.split(jax.random.PRNGKey(1), 3)
    B2, H2, Lc2, La2 = 2, 32, 600, 1300
    D2 = 2 * H2
    ctx2 = jax.random.normal(k4, (B2, Lc2, D2), dtype=jnp.float32)
    asp2 = jax.random.normal(k5, (B2, La2, D2), dtype=jnp.float32)
    w_u2 = jax.random.normal(k6, (6 * H2, 1), dtype=jnp.float32) * 0.1
    out2 = alignment_matrix(ctx2, asp2, w_u2)
    jax.block_until_ready(out2)
    ref2 = alignment_matrix_ref(ctx2, asp2, w_u2)
    assert out2.shape == (B2, Lc2, La2)
    assert jnp.allclose(out2, ref2, atol=5e-4, rtol=5e-4)

    print("KERNEL_OK")
</pallas_src>

<mosaic_0001>
module attributes {stable_mosaic.version = 11 : i64} {
  func.func @_alignment_kernel(%arg0: i32, %arg1: i32, %arg2: i32, %arg3: memref<1x8x32xf32, #tpu.memory_space<vmem>>, %arg4: memref<1x8x32xf32, #tpu.memory_space<vmem>>, %arg5: memref<3x32xf32, #tpu.memory_space<vmem>>, %arg6: memref<1x8x8xf32, #tpu.memory_space<vmem>>) attributes {dimension_semantics = [#tpu.dimension_semantics<parallel>, #tpu.dimension_semantics<parallel>, #tpu.dimension_semantics<parallel>], iteration_bounds = array<i64: 2, 1, 1>, scalar_prefetch = 0 : i64, scratch_operands = 0 : i64, tpu.core_type = #tpu.core_type<tc>, window_params = [{transform_indices = @transform_0, window_bounds = array<i64: 1, 8, 32>}, {transform_indices = @transform_1, window_bounds = array<i64: 1, 8, 32>}, {pipeline_mode = #tpu.pipeline_mode<synchronous>, transform_indices = @transform_2, window_bounds = array<i64: 3, 32>}, {transform_indices = @transform_3, window_bounds = array<i64: 1, 8, 8>}]} {
    %c0 = arith.constant 0 : index
    %c0_0 = arith.constant 0 : index
    %c0_1 = arith.constant 0 : index
    %0 = vector.load %arg3[%c0, %c0_0, %c0_1] : memref<1x8x32xf32, #tpu.memory_space<vmem>>, vector<1x8x32xf32>
    %c0_2 = arith.constant 0 : index
    %c0_3 = arith.constant 0 : index
    %c0_4 = arith.constant 0 : index
    %1 = vector.load %arg4[%c0_2, %c0_3, %c0_4] : memref<1x8x32xf32, #tpu.memory_space<vmem>>, vector<1x8x32xf32>
    %c0_5 = arith.constant 0 : index
    %c0_6 = arith.constant 0 : index
    %2 = vector.load %arg5[%c0_5, %c0_6] : memref<3x32xf32, #tpu.memory_space<vmem>>, vector<3x32xf32>
    %3 = vector.extract_strided_slice %2 {offsets = [0, 0], sizes = [1, 32], strides = [1, 1]} : vector<3x32xf32> to vector<1x32xf32>
    %4 = vector.shape_cast %3 : vector<1x32xf32> to vector<32xf32>
    %5 = vector.shape_cast %4 : vector<32xf32> to vector<1x1x32xf32>
    %6 = vector.extract_strided_slice %2 {offsets = [1, 0], sizes = [1, 32], strides = [1, 1]} : vector<3x32xf32> to vector<1x32xf32>
    %7 = vector.shape_cast %6 : vector<1x32xf32> to vector<32xf32>
    %8 = vector.shape_cast %7 : vector<32xf32> to vector<1x1x32xf32>
    %9 = vector.extract_strided_slice %2 {offsets = [2, 0], sizes = [1, 32], strides = [1, 1]} : vector<3x32xf32> to vector<1x32xf32>
    %10 = vector.shape_cast %9 : vector<1x32xf32> to vector<32xf32>
    %11 = vector.shape_cast %10 : vector<32xf32> to vector<1x1x32xf32>
    %12 = vector.broadcast %5 : vector<1x1x32xf32> to vector<1x8x32xf32>
    %13 = arith.mulf %0, %12 : vector<1x8x32xf32>
    %cst = arith.constant dense<0.000000e+00> : vector<1x8xf32>
    %14 = vector.multi_reduction <add>, %13, %cst [2] : vector<1x8x32xf32> to vector<1x8xf32>
    %15 = vector.shape_cast %14 : vector<1x8xf32> to vector<1x8x1xf32>
    %16 = vector.broadcast %8 : vector<1x1x32xf32> to vector<1x8x32xf32>
    %17 = arith.mulf %1, %16 : vector<1x8x32xf32>
    %cst_7 = arith.constant dense<0.000000e+00> : vector<1x8xf32>
    %18 = vector.multi_reduction <add>, %17, %cst_7 [2] : vector<1x8x32xf32> to vector<1x8xf32>
    %19 = vector.shape_cast %18 : vector<1x8xf32> to vector<1x1x8xf32>
    %20 = vector.broadcast %11 : vector<1x1x32xf32> to vector<1x8x32xf32>
    %21 = arith.mulf %0, %20 : vector<1x8x32xf32>
    %cst_8 = arith.constant dense<0.000000e+00> : vector<1x8x8xf32>
    %22 = tpu.matmul %21, %1, %cst_8 {dimension_numbers = #tpu.dot_dimension_numbers<[2], [2], [1], [1], [0, 0, 0, 1, 1, 1], [0], [0]>} : vector<1x8x32xf32>, vector<1x8x32xf32>, vector<1x8x8xf32> -> vector<1x8x8xf32>
    %23 = vector.broadcast %15 : vector<1x8x1xf32> to vector<1x8x8xf32>
    %24 = vector.broadcast %19 : vector<1x1x8xf32> to vector<1x8x8xf32>
    %25 = arith.addf %23, %24 : vector<1x8x8xf32>
    %26 = arith.addf %25, %22 : vector<1x8x8xf32>
    %c0_9 = arith.constant 0 : index
    %c0_10 = arith.constant 0 : index
    %c0_11 = arith.constant 0 : index
    %27 = vector.load %arg6[%c0_9, %c0_10, %c0_11] : memref<1x8x8xf32, #tpu.memory_space<vmem>>, vector<1x8x8xf32>
    tpu.vector_store %arg6[%c0_9, %c0_10, %c0_11], %26 {strides = array<i32>} : memref<1x8x8xf32, #tpu.memory_space<vmem>>, vector<1x8x8xf32>,
    return
  }
  func.func @transform_0(%arg0: i32, %arg1: i32, %arg2: i32) -> (i32, i32, i32) {
    %c0_i32 = arith.constant 0 : i32
    %c0_i32_0 = arith.constant 0 : i32
    return %arg0, %arg1, %c0_i32 : i32, i32, i32
  }
  func.func @transform_1(%arg0: i32, %arg1: i32, %arg2: i32) -> (i32, i32, i32) {
    %c0_i32 = arith.constant 0 : i32
    %c0_i32_0 = arith.constant 0 : i32
    return %arg0, %arg2, %c0_i32 : i32, i32, i32
  }
  func.func @transform_2(%arg0: i32, %arg1: i32, %arg2: i32) -> (i32, i32) {
    %c0_i32 = arith.constant 0 : i32
    %c0_i32_0 = arith.constant 0 : i32
    %c0_i32_1 = arith.constant 0 : i32
    return %c0_i32, %c0_i32_0 : i32, i32
  }
  func.func @transform_3(%arg0: i32, %arg1: i32, %arg2: i32) -> (i32, i32, i32) {
    %c0_i32 = arith.constant 0 : i32
    return %arg0, %arg1, %arg2 : i32, i32, i32
  }
}

</mosaic_0001>

<llo_original>
// kernel: tpu_custom_call.1
$region0: #{tpu_custom_call.1}
  #allocation0 [shape = 'u32[]', space=smem, size = 0x4, offset = 0x4, fixed_abs, tag = 'smem constant byte address 0x4 - core index']
  #allocation1 [shape = 'u32[144,128]{1,0:T(1,128)}', space=vmem, size = 0x12000, scoped, tag = 'internal scratch']
  %s0 = inlined_call_operand.hbm [shape: f32[2,8,32], index: 0, kind: input, shape index: {}]
  %s1 = inlined_call_operand.hbm [shape: f32[2,8,32], index: 1, kind: input, shape index: {}]
  %s2 = inlined_call_operand.vmem [shape: f32[3,32], index: 2, kind: input, shape index: {}]
  %s3 = inlined_call_operand.hbm [shape: f32[2,8,8], index: 3, kind: output, shape index: {}]
  %s4 = sld [smem:[#allocation0]]
  $region53: #{tpu_custom_call.1} parent=0
    _
  %s6 = ssub.s32 1, %s4
  %s7 = scalar_select 0, %s6, %s4
  $region1: #{tpu_custom_call.1} parent=0
    #allocation2 [shape = 'u8[8192]{0}', space=vmem, size = 0x2000, scoped, tag = 'input window, operand 0']
    #allocation3 [shape = 's32[2]{0}', space=sflag, size = 0x8, scoped, tag = 'scoped memory for tpu_custom_call.1']
    #allocation4 [shape = 's32[2]{0}', space=sflag, size = 0x8, scoped, tag = 'scoped memory for tpu_custom_call.1']
    #allocation5 [shape = 'u8[8192]{0}', space=vmem, size = 0x2000, scoped, tag = 'input window, operand 1']
    #allocation6 [shape = 's32[2]{0}', space=sflag, size = 0x8, scoped, tag = 'scoped memory for tpu_custom_call.1']
    #allocation7 [shape = 'u8[8192]{0}', space=vmem, size = 0x2000, scoped, tag = 'output window, operand 0']
    %8 = vsyncpa [#allocation3], 0
    %s9 = scalar_lea.sflag [#allocation3], 1
    %10 = vsyncpa %s9, 0
    %11 = vsyncpa [#allocation6], 0
    %s12 = scalar_lea.sflag [#allocation6], 1
    %13 = vsyncpa %s12, 0
    %14 = vsyncpa [#allocation4], 0
    %s15 = scalar_lea.sflag [#allocation4], 1
    %16 = vsyncpa %s15, 0
    loop: start=0, step=1, limit=4
    $region2: #{tpu_custom_call.1} parent=1 // loop_pre_header
      _
    $region3: #{tpu_custom_call.1} parent=1 // loop_header
      %s18 = sphi 0, %s22
      %p19 = scmp.ge.s32.totalorder %s18, 4
      %s25 = sphi 0, %s44
      %s26 = sphi 0, %s40
      %s27 = sphi 0, %s36
      %s28 = sphi 0, %s25
      %s29 = sphi 0, %s26
      %s30 = sphi 0, %s27
      %s31 = sphi 0, %s28
      %s32 = sphi 0, %s29
      %s33 = sphi 0, %s30
      %s49 = sphi 0, %s51
      %s52 = sphi 0, %s49
      %s53 = sphi 0, %s52
      %s69 = sphi 0, %s53
      %s77 = sphi 0, %s79
      %s80 = sphi 0, %s77
      %s81 = sphi 0, %s80
      %s97 = sphi 0, %s81
      %s101 = sphi 0, %s101
      %s103 = sphi 0, %s101
      %s104 = sphi 0, %s103
      %s118 = sphi 0, %s104
      %s128 = sphi 0, %s130
      %s131 = sphi 0, %s128
      %s132 = sphi 0, %s131
      %s148 = sphi 0, %s132
    $region4: #{tpu_custom_call.1} parent=1 // loop_header_branch
      %21 = sbr.rel (%p19) target = $region8
    $region5: #{tpu_custom_call.1} parent=1 // loop_body
      %s23 = ssub.s32 %s18, 1
      %s24 = ssub.s32 %s18, 2
      %s34 = sadd.s32 1, %s27
      %p35 = scmp.ge.s32.totalorder %s34, 1
      %s36 = scalar_select %p35, 0, %s34
      %s37 = sadd.s32 1, %s26
      %s38 = scalar_select %p35, %s37, %s26
      %p39 = scmp.ge.s32.totalorder %s38, 1
      %s40 = scalar_select %p39, 0, %s38
      %s41 = sadd.s32 1, %s25
      %s42 = scalar_select %p39, %s41, %s25
      %p43 = scmp.ge.s32.totalorder %s42, 2
      %s44 = scalar_select %p43, 0, %s42
      %s45 = ssub.s32 %s25, %s44
      %s46 = ssub.s32 %s26, %s40
      %s47 = sor.u32 %s45, %s46
      %p48 = scmp.eq.s32.totalorder %s47, 0
      %s50 = sadd.s32 %s49, 1
      %s51 = scalar_select %p48, %s49, %s50
      %p54 = pneg %p48
      %p55 = scmp.eq.s32.totalorder %s18, 1
      %p56 = por %p54, %p55
      %p57 = scmp.ne.s32.totalorder %s49, %s52
      %p58 = scmp.eq.s32.totalorder %s18, 0
      %p59 = por %p57, %p58
      %p60 = scmp.ne.s32.totalorder %s49, %s52
      %p61 = scmp.eq.s32.totalorder %s23, 1
      %p62 = por %p60, %p61
      %p63 = scmp.ne.s32.totalorder %s52, %s53
      %p64 = scmp.eq.s32.totalorder %s23, 0
      %p65 = por %p63, %p64
      %p66 = scmp.ne.s32.totalorder %s52, %s53
      %p67 = scmp.eq.s32.totalorder %s24, 1
      %p68 = por %p66, %p67
      %p70 = scmp.ne.s32.totalorder %s53, %s69
      %p71 = scmp.eq.s32.totalorder %s24, 0
      %p72 = por %p70, %p71
      %s73 = ssub.s32 %s25, %s44
      %s74 = ssub.s32 %s27, %s36
      %s75 = sor.u32 %s73, %s74
      %p76 = scmp.eq.s32.totalorder %s75, 0
      %s78 = sadd.s32 %s77, 1
      %s79 = scalar_select %p76, %s77, %s78
      %p82 = pneg %p76
      %p83 = scmp.eq.s32.totalorder %s18, 1
      %p84 = por %p82, %p83
      %p85 = scmp.ne.s32.totalorder %s77, %s80
      %p86 = scmp.eq.s32.totalorder %s18, 0
      %p87 = por %p85, %p86
      %p88 = scmp.ne.s32.totalorder %s77, %s80
      %p89 = scmp.eq.s32.totalorder %s23, 1
      %p90 = por %p88, %p89
      %p91 = scmp.ne.s32.totalorder %s80, %s81
      %p92 = scmp.eq.s32.totalorder %s23, 0
      %p93 = por %p91, %p92
      %p94 = scmp.ne.s32.totalorder %s80, %s81
      %p95 = scmp.eq.s32.totalorder %s24, 1
      %p96 = por %p94, %p95
      %p98 = scmp.ne.s32.totalorder %s81, %s97
      %p99 = scmp.eq.s32.totalorder %s24, 0
      %p100 = por %p98, %p99
      %s102 = sadd.s32 %s101, 1
      %p105 = scmp.eq.s32.totalorder %s18, 1
      %p106 = scmp.ne.s32.totalorder %s101, %s103
      %p107 = scmp.eq.s32.totalorder %s18, 0
      %p108 = por %p106, %p107
      %p109 = scmp.ne.s32.totalorder %s101, %s103
      %p110 = scmp.eq.s32.totalorder %s23, 1
      %p111 = por %p109, %p110
      %p112 = scmp.ne.s32.totalorder %s103, %s104
      %p113 = scmp.eq.s32.totalorder %s23, 0
      %p114 = por %p112, %p113
      %p115 = scmp.ne.s32.totalorder %s103, %s104
      %p116 = scmp.eq.s32.totalorder %s24, 1
      %p117 = por %p115, %p116
      %p119 = scmp.ne.s32.totalorder %s104, %s118
      %p120 = scmp.eq.s32.totalorder %s24, 0
      %p121 = por %p119, %p120
      %s122 = ssub.s32 %s25, %s44
      %s123 = ssub.s32 %s26, %s40
      %s124 = sor.u32 %s122, %s123
      %s125 = ssub.s32 %s27, %s36
      %s126 = sor.u32 %s124, %s125
      %p127 = scmp.eq.s32.totalorder %s126, 0
      %s129 = sadd.s32 %s128, 1
      %s130 = scalar_select %p127, %s128, %s129
      %p133 = pneg %p127
      %p134 = scmp.eq.s32.totalorder %s18, 1
      %p135 = por %p133, %p134
      %p136 = scmp.ne.s32.totalorder %s128, %s131
      %p137 = scmp.eq.s32.totalorder %s18, 0
      %p138 = por %p136, %p137
      %p139 = scmp.ne.s32.totalorder %s128, %s131
      %p140 = scmp.eq.s32.totalorder %s23, 1
      %p141 = por %p139, %p140
      %p142 = scmp.ne.s32.totalorder %s131, %s132
      %p143 = scmp.eq.s32.totalorder %s23, 0
      %p144 = por %p142, %p143
      %p145 = scmp.ne.s32.totalorder %s131, %s132
      %p146 = scmp.eq.s32.totalorder %s24, 1
      %p147 = por %p145, %p146
      %p149 = scmp.ne.s32.totalorder %s132, %s148
      %p150 = scmp.eq.s32.totalorder %s24, 0
      %p151 = por %p149, %p150
      %p152 = scmp.le.s32.totalorder 1, %s18
      %p153 = scmp.lt.s32.totalorder %s18, 3
      %p154 = pnand %p152, %p153
      %p155 = pneg %p154
      // Predicated region
      $region9: #{tpu_custom_call.1} parent=5 // pred_check
        _
      $region10: #{tpu_custom_call.1} parent=5 // pred_check_branch
        %157 = sbr.rel (%p154) target = $region12
      $region11: #{tpu_custom_call.1} parent=5 // pred_region
        %s158 = ssub.s32 %s18, 1
        // Predicated region
        $region13: #{tpu_custom_call.1} parent=11 // pred_check
          %p159 = pneg %p114
        $region14: #{tpu_custom_call.1} parent=11 // pred_check_branch
          %161 = sbr.rel (%p159) target = $region16
        $region15: #{tpu_custom_call.1} parent=11 // pred_region
          _
        $region16: #{tpu_custom_call.1} parent=11 // pred_fallthru
          _
      $region12: #{tpu_custom_call.1} parent=5 // pred_fallthru
        _
      %p162 = scmp.lt.s32.totalorder %s18, 2
      // Predicated region
      $region17: #{tpu_custom_call.1} parent=5 // pred_check
        %p163 = pneg %p162
      $region18: #{tpu_custom_call.1} parent=5 // pred_check_branch
        %165 = sbr.rel (%p163) target = $region20
      $region19: #{tpu_custom_call.1} parent=5 // pred_region
        // Predicated region
        $region21: #{tpu_custom_call.1} parent=19 // pred_check
          %p166 = pneg %p59
        $region22: #{tpu_custom_call.1} parent=19 // pred_check_branch
          %168 = sbr.rel (%p166) target = $region24
        $region23: #{tpu_custom_call.1} parent=19 // pred_region
          %s169 = sand.u32 %s49, 1
          %s170 = scalar_lea.sflag [#allocation3], %s169
          %s171 = sand.u32 %s49, 1
          %s172 = smul.addr %s171, 8
          %s173 = scalar_lea.vmem [#allocation2], %s172
          %s175 = ssub.s32 128, 128
          %176 = vsyncadd %s170, %s175
          %s177 = sadd.s32 %s26, %s25
          %s178 = smul.addr %s177, 128
          %s179 = scalar_lea.hbm %s0, %s178
          %s181 = sshll.u32 %s173, 4
          %s182 = int_to_ptr.vmem [resolvable:$true] %s181
          %184 = dma.hbm_to_vmem [thread:$0]  %s179, 128, %s182, %s170
        $region24: #{tpu_custom_call.1} parent=19 // pred_fallthru
          _
        // Predicated region
        $region25: #{tpu_custom_call.1} parent=19 // pred_check
          %p185 = pneg %p87
        $region26: #{tpu_custom_call.1} parent=19 // pred_check_branch
          %187 = sbr.rel (%p185) target = $region28
        $region27: #{tpu_custom_call.1} parent=19 // pred_region
          %s188 = sand.u32 %s77, 1
          %s189 = scalar_lea.sflag [#allocation6], %s188
          %s190 = sand.u32 %s77, 1
          %s191 = smul.addr %s190, 8
          %s192 = scalar_lea.vmem [#allocation5], %s191
          %s194 = ssub.s32 128, 128
          %195 = vsyncadd %s189, %s194
          %s196 = sadd.s32 %s27, %s25
          %s197 = smul.addr %s196, 128
          %s198 = scalar_lea.hbm %s1, %s197
          %s200 = sshll.u32 %s192, 4
          %s201 = int_to_ptr.vmem [resolvable:$true] %s200
          %203 = dma.hbm_to_vmem [thread:$0]  %s198, 128, %s201, %s189
        $region28: #{tpu_custom_call.1} parent=19 // pred_fallthru
          _
      $region20: #{tpu_custom_call.1} parent=5 // pred_fallthru
        _
      %p204 = scmp.le.s32.totalorder 1, %s18
      %p205 = scmp.lt.s32.totalorder %s18, 3
      %p206 = pnand %p204, %p205
      %p207 = pneg %p206
      // Predicated region
      $region29: #{tpu_custom_call.1} parent=5 // pred_check
        _
      $region30: #{tpu_custom_call.1} parent=5 // pred_check_branch
        %209 = sbr.rel (%p206) target = $region32
      $region31: #{tpu_custom_call.1} parent=5 // pred_region
        %s210 = ssub.s32 %s18, 1
        %s211 = sand.u32 %s52, 1
        %s212 = scalar_lea.sflag [#allocation3], %s211
        %s213 = sand.u32 %s52, 1
        %s214 = smul.addr %s213, 8
        %s215 = scalar_lea.vmem [#allocation2], %s214
        // Predicated region
        $region33: #{tpu_custom_call.1} parent=31 // pred_check
          %p216 = pneg %p65
        $region34: #{tpu_custom_call.1} parent=31 // pred_check_branch
          %218 = sbr.rel (%p216) target = $region36
        $region35: #{tpu_custom_call.1} parent=31 // pred_region
          %219 = dma.done %s212, 128
        $region36: #{tpu_custom_call.1} parent=31 // pred_fallthru
          _
        %s220 = sand.u32 %s80, 1
        %s221 = scalar_lea.sflag [#allocation6], %s220
        %s222 = sand.u32 %s80, 1
        %s223 = smul.addr %s222, 8
        %s224 = scalar_lea.vmem [#allocation5], %s223
        // Predicated region
        $region37: #{tpu_custom_call.1} parent=31 // pred_check
          %p225 = pneg %p93
        $region38: #{tpu_custom_call.1} parent=31 // pred_check_branch
          %227 = sbr.rel (%p225) target = $region40
        $region39: #{tpu_custom_call.1} parent=31 // pred_region
          %228 = dma.done %s221, 128
        $region40: #{tpu_custom_call.1} parent=31 // pred_fallthru
          _
        %s229 = sand.u32 %s52, 1
        %s230 = scalar_lea.sflag [#allocation3], %s229
        %s231 = sand.u32 %s52, 1
        %s232 = smul.addr %s231, 8
        %s233 = scalar_lea.vmem [#allocation2], %s232
        %p234 = pneg %p65
        %p235 = pneg %p62
        %s236 = sand.u32 %s80, 1
        %s237 = scalar_lea.sflag [#allocation6], %s236
        %s238 = sand.u32 %s80, 1
        %s239 = smul.addr %s238, 8
        %s240 = scalar_lea.vmem [#allocation5], %s239
        %p241 = pneg %p93
        %p242 = pneg %p90
        %p243 = pneg %p114
        %p244 = pneg %p111
        %p245 = pneg %p144
        %p246 = pneg %p141
        %s247 = sand.u32 %s131, 1
        %s248 = scalar_lea.sflag [#allocation4], %s247
        %s249 = sand.u32 %s131, 1
        %s250 = smul.addr %s249, 8
        %s251 = scalar_lea.vmem [#allocation7], %s250
        %v252 = vld [vmem:[%s215] sm:$0xff]
        %v253 = vld [vmem:[%s224] sm:$0xff]
        %v254 = vld [vmem:[%s2] sm:$0x7]
        %v255 = vlaneseq
        %v256 = vshrl.u32 %v255, 7
        %v257 = vsub.s32 0, %v256
        %v258 = vrot.slane %v254, %v257
        %v259 = vmul.f32 %v252, %v258
        %vm260 = vcmask 261120
        %v261 = vsel %vm260, %v259, 0.0
        %262 = vadd.xlane.f32.xlu0 %v261
        %v263 = vpop.xlane.xlu0 %262
        %v264 = vlaneseq
        %v265 = vshrl.u32 %v264, 7
        %v266 = vsub.s32 1, %v265
        %v267 = vrot.slane %v254, %v266
        %v268 = vmul.f32 %v253, %v267
        %v269 = vsel %vm260, %v268, 0.0
        %270 = vadd.xlane.f32.xlu0 %v269
        %v271 = vpop.xlane.xlu0 %270
        %v272 = vlaneseq
        %v273 = vshrl.u32 %v272, 7
        %v274 = vsub.s32 2, %v273
        %v275 = vrot.slane %v254, %v274
        %v276 = vmul.f32 %v252, %v275
        %v278 = vsel %vm260, %v276, 0
        %v281 = vsel %vm260, %v253, 0
        %283 = vmatprep.subr.mxu0 0.0
        %284 = vmatpush1.xpose.msra.mxu0 %v281
        %285 = vmatprep.subr.mxu0 0.0
        %286 = vmatpush1.xpose.msra.mxu0 0.0
        %287 = vmatprep.subr.mxu0 0.0
        %288 = vmatpush1.xpose.msra.mxu0 0.0
        %289 = vmatprep.subr.mxu0 0.0
        %290 = vmatpush1.xpose.msra.mxu0 0.0
        %291 = vmatprep.subr.mxu0 0.0
        %292 = vmatpush1.xpose.msra.mxu0 0.0
        %293 = vmatprep.subr.mxu0 0.0
        %294 = vmatpush1.xpose.msra.mxu0 0.0
        %295 = vmatprep.subr.mxu0 0.0
        %296 = vmatpush1.xpose.msra.mxu0 0.0
        %297 = vmatprep.subr.mxu0 0.0
        %298 = vmatpush1.xpose.msra.mxu0 0.0
        %299 = vmatprep.subr.mxu0 0.0
        %300 = vmatpush1.xpose.msra.mxu0 0.0
        %301 = vmatprep.subr.mxu0 0.0
        %302 = vmatpush1.xpose.msra.mxu0 0.0
        %303 = vmatprep.subr.mxu0 0.0
        %304 = vmatpush1.xpose.msra.mxu0 0.0
        %305 = vmatprep.subr.mxu0 0.0
        %306 = vmatpush1.xpose.msra.mxu0 0.0
        %307 = vmatprep.subr.mxu0 0.0
        %308 = vmatpush1.xpose.msra.mxu0 0.0
        %309 = vmatprep.subr.mxu0 0.0
        %310 = vmatpush1.xpose.msra.mxu0 0.0
        %311 = vmatprep.subr.mxu0 0.0
        %312 = vmatpush1.xpose.msra.mxu0 0.0
        %313 = vmatprep.subr.mxu0 0.0
        %314 = vmatpush1.xpose.msra.mxu0 0.0
        %315 = vmatprep.subr.mxu0 0.0
        %316 = vmatpush1.xpose.msra.mxu0 0.0
        %317 = vmatprep.subr.mxu0 0.0
        %318 = vmatpush1.xpose.msra.mxu0 0.0
        %319 = vmatprep.subr.mxu0 0.0
        %320 = vmatpush1.xpose.msra.mxu0 0.0
        %321 = vmatprep.subr.mxu0 0.0
        %322 = vmatpush1.xpose.msra.mxu0 0.0
        %323 = vmatprep.subr.mxu0 0.0
        %324 = vmatpush1.xpose.msra.mxu0 0.0
        %325 = vmatprep.subr.mxu0 0.0
        %326 = vmatpush1.xpose.msra.mxu0 0.0
        %327 = vmatprep.subr.mxu0 0.0
        %328 = vmatpush1.xpose.msra.mxu0 0.0
        %329 = vmatprep.subr.mxu0 0.0
        %330 = vmatpush1.xpose.msra.mxu0 0.0
        %331 = vmatprep.subr.mxu0 0.0
        %332 = vmatpush1.xpose.msra.mxu0 0.0
        %333 = vmatprep.subr.mxu0 0.0
        %334 = vmatpush1.xpose.msra.mxu0 0.0
        %335 = vmatprep.subr.mxu0 0.0
        %336 = vmatpush1.xpose.msra.mxu0 0.0
        %337 = vmatprep.subr.mxu0 0.0
        %338 = vmatpush1.xpose.msra.mxu0 0.0
        %339 = vmatprep.subr.mxu0 0.0
        %340 = vmatpush1.xpose.msra.mxu0 0.0
        %341 = vmatprep.subr.mxu0 0.0
        %342 = vmatpush1.xpose.msra.mxu0 0.0
        %343 = vmatprep.subr.mxu0 0.0
        %344 = vmatpush1.xpose.msra.mxu0 0.0
        %345 = vmatprep.subr.mxu0 0.0
        %346 = vmatpush1.xpose.msra.mxu0 0.0
        %347 = vmatprep.mubr.f32.mxu0 0.0
        %348 = vmatmul.mubr.f32.gmra.mrb[0].mxu0 %v278
        %v349 = vpop.f32.mrb[0].mxu0
        %v350 = vadd.f32 0.0, %v349
        %v351 = vpop.f32.mrb[0].mxu0
        %352 = vdwg.mxu0
        %v354 = vlaneseq
        %v355 = vand.u32 %v354, 127
        %v356 = vlaneseq
        %v357 = vshrl.u32 %v356, 7
        %v358 = vsub.s32 %v355, %v357
        %v359 = vrot.slane %v271, %v358
        %vm360 = vcmask 1042434
        %v361 = vsel %vm360, %v359, %v359
        %vm362 = vcmask 1043459
        %v363 = vsel %vm362, %v359, %v361
        %vm364 = vcmask 1044484
        %v365 = vsel %vm364, %v359, %v363
        %vm366 = vcmask 1045509
        %v367 = vsel %vm366, %v359, %v365
        %vm368 = vcmask 1046534
        %v369 = vsel %vm368, %v359, %v367
        %vm370 = vcmask 1047559
        %v371 = vsel %vm370, %v359, %v369
        %v373 = vadd.f32 %v263, %v371
        %v374 = vadd.f32 %v373, %v350
        %vm375 = vcmask 64512
        %376 = vst.msk [vmem:[%s251] sm:$0xff] %vm375, %v374
        %s377 = sand.u32 %s131, 1
        %s378 = scalar_lea.sflag [#allocation4], %s377
        %s379 = sand.u32 %s131, 1
        %s380 = smul.addr %s379, 8
        %s381 = scalar_lea.vmem [#allocation7], %s380
        // Predicated region
        $region41: #{tpu_custom_call.1} parent=31 // pred_check
          %p382 = pneg %p141
        $region42: #{tpu_custom_call.1} parent=31 // pred_check_branch
          %384 = sbr.rel (%p382) target = $region44
        $region43: #{tpu_custom_call.1} parent=31 // pred_region
          %s386 = ssub.s32 128, 128
          %387 = vsyncadd %s378, %s386
          %s388 = sadd.s32 %s30, %s29
          %s389 = sadd.s32 %s388, %s28
          %s390 = smul.addr %s389, 128
          %s391 = scalar_lea.hbm %s3, %s390
          %s393 = sshll.u32 %s381, 4
          %s394 = int_to_ptr.vmem [resolvable:$true] %s393
          %396 = dma.vmem_to_hbm [thread:$0]  %s394, 128, %s391, %s378
        $region44: #{tpu_custom_call.1} parent=31 // pred_fallthru
          _
      $region32: #{tpu_custom_call.1} parent=5 // pred_fallthru
        _
      %p397 = scmp.le.s32.totalorder 2, %s18
      // Predicated region
      $region45: #{tpu_custom_call.1} parent=5 // pred_check
        %p398 = pneg %p397
      $region46: #{tpu_custom_call.1} parent=5 // pred_check_branch
        %400 = sbr.rel (%p398) target = $region48
      $region47: #{tpu_custom_call.1} parent=5 // pred_region
        %s401 = ssub.s32 %s18, 2
        // Predicated region
        $region49: #{tpu_custom_call.1} parent=47 // pred_check
          %p402 = pneg %p147
        $region50: #{tpu_custom_call.1} parent=47 // pred_check_branch
          %404 = sbr.rel (%p402) target = $region52
        $region51: #{tpu_custom_call.1} parent=47 // pred_region
          %s405 = sand.u32 %s132, 1
          %s406 = scalar_lea.sflag [#allocation4], %s405
          %s407 = sand.u32 %s132, 1
          %s408 = smul.addr %s407, 8
          %s409 = scalar_lea.vmem [#allocation7], %s408
          %410 = dma.done %s406, 128
        $region52: #{tpu_custom_call.1} parent=47 // pred_fallthru
          _
      $region48: #{tpu_custom_call.1} parent=5 // pred_fallthru
        _
    $region6: #{tpu_custom_call.1} parent=1 // loop_footer
      %s22 = sadd.s32 1, %s18
    $region7: #{tpu_custom_call.1} parent=1 // loop_footer_branch
      %17 = sbr.rel target = $region3
    $region8: #{tpu_custom_call.1} parent=1 // loop_exit
      _
    %411 = vsyncpa [#allocation3], 1
    %s412 = scalar_lea.sflag [#allocation3], 1
    %413 = vsyncpa %s412, 1
    %414 = vsyncpa [#allocation6], 1
    %s415 = scalar_lea.sflag [#allocation6], 1
    %416 = vsyncpa %s415, 1
    %417 = vsyncpa [#allocation4], 1
    %s418 = scalar_lea.sflag [#allocation4], 1
    %419 = vsyncpa %s418, 1

</llo_original>
